<compile_context>
chip_gen: v6e
topology: v6e:2x2x1
jax: 0.10.0
libtpu: 0.0.40
codegen_flags: <defaults>
</compile_context>

<pallas_src>
import jax
import jax.numpy as jnp
from jax.experimental import pallas as pl
from jax.experimental.pallas import tpu as pltpu


def _copy_kernel(x_ref, o_ref):
    # Straight tile copy: the chomp is expressed in the grid/index_map.
    o_ref[...] = x_ref[...]


def _round_up(x: int, m: int) -> int:
    return ((x + m - 1) // m) * m


def _sublane_pack(dtype) -> int:
    # Sub-32-bit dtypes pack along sublanes: 8 rows/f32, 16/bf16, 32/int8-fp8.
    itemsize = jnp.dtype(dtype).itemsize
    return max(8, 32 // itemsize)


def chomp1d(x: jax.Array, chomp_size: int,
            *, row_tile: int = 512, lane_tile: int = 2048) -> jax.Array:
    """Pallas equivalent of Chomp1d.forward: x[:, :, :-chomp_size]."""
    # TODO(synk): chomp_size == 0 would return an empty tensor in PyTorch
    # (x[:, :, :-0] == x[:, :, :0]); rejected here as it needs no kernel.
    assert chomp_size > 0, "chomp_size must be positive"
    n, c, l = x.shape
    l_out = l - chomp_size
    assert l_out > 0, "chomp_size must be smaller than the length dimension"

    pack = _sublane_pack(x.dtype)
    itemsize = jnp.dtype(x.dtype).itemsize

    # Lane tile: 128-aligned (unmasked vst on all but the ragged last tile).
    tl = min(lane_tile, _round_up(l_out, 128))

    cost = pl.CostEstimate(flops=0, transcendentals=0,
                           bytes_accessed=2 * n * c * l_out * itemsize)
    cparams_kw = dict(vmem_limit_bytes=32 * 1024 * 1024)

    # (N, C) can be flattened without an HBM re-tiling copy only when each
    # batch's channel rows occupy whole sublane tiles (or there is a single
    # batch).  Otherwise keep the 3D layout — the relayout copy would cost a
    # full extra HBM read+write pass on each side of a pure-copy kernel.
    flatten_free = (c % pack == 0) or (n == 1)

    if flatten_free:
        rows = n * c
        x2d = x.reshape(rows, l)
        tr = min(row_tile, _round_up(rows, pack))   # both multiples of `pack`
        grid = (pl.cdiv(rows, tr), pl.cdiv(l_out, tl))
        out2d = pl.pallas_call(
            _copy_kernel,
            out_shape=jax.ShapeDtypeStruct((rows, l_out), x.dtype),
            grid=grid,
            in_specs=[pl.BlockSpec((tr, tl), lambda i, j: (i, j))],
            out_specs=pl.BlockSpec((tr, tl), lambda i, j: (i, j)),
            compiler_params=pltpu.CompilerParams(
                dimension_semantics=("parallel", "parallel"), **cparams_kw),
            cost_estimate=cost,
        )(x2d)
        return out2d.reshape(n, c, l_out)

    # 3D path: no flatten, no relayout.  Channel tile is either the full
    # channel extent (always a legal block dim) or a pack-aligned tile.
    if c <= row_tile:
        tc = c
    else:
        tc = (row_tile // pack) * pack
    grid = (n, pl.cdiv(c, tc), pl.cdiv(l_out, tl))
    out = pl.pallas_call(
        _copy_kernel,
        out_shape=jax.ShapeDtypeStruct((n, c, l_out), x.dtype),
        grid=grid,
        in_specs=[pl.BlockSpec((1, tc, tl), lambda b, i, j: (b, i, j))],
        out_specs=pl.BlockSpec((1, tc, tl), lambda b, i, j: (b, i, j)),
        compiler_params=pltpu.CompilerParams(
            dimension_semantics=("parallel", "parallel", "parallel"),
            **cparams_kw),
        cost_estimate=cost,
    )(x)
    return out


if __name__ == "__main__":
    key = jax.random.PRNGKey(0)

    # Case 1: C not sublane-aligned -> 3D (no-flatten) path.
    batch, channels, length = 2, 4, 16
    chomp_size = 3  # Chomp1d(chomp_size=3)
    x = jax.random.normal(key, (batch, channels, length), dtype=jnp.float32)
    out = jax.block_until_ready(chomp1d(x, chomp_size))
    ref = x[:, :, :-chomp_size]
    assert out.shape == (batch, channels, length - chomp_size), out.shape
    assert out.dtype == x.dtype
    assert jnp.array_equal(out, ref), "mismatch vs reference slice (3D path)"

    # Case 2: C sublane-aligned -> flattened 2D path.
    key2 = jax.random.PRNGKey(0)
    x2 = jax.random.normal(key2, (2, 8, 16), dtype=jnp.float32)
    out2 = jax.block_until_ready(chomp1d(x2, chomp_size))
    assert jnp.array_equal(out2, x2[:, :, :-chomp_size]), \
        "mismatch vs reference slice (2D path)"

    print("KERNEL_OK")
</pallas_src>

<mosaic_0001>
module attributes {stable_mosaic.version = 11 : i64} {
  func.func @_copy_kernel(%arg0: i32, %arg1: i32, %arg2: i32, %arg3: memref<1x4x128xf32, #tpu.memory_space<vmem>>, %arg4: memref<1x4x128xf32, #tpu.memory_space<vmem>>) attributes {dimension_semantics = [#tpu.dimension_semantics<parallel>, #tpu.dimension_semantics<parallel>, #tpu.dimension_semantics<parallel>], iteration_bounds = array<i64: 2, 1, 1>, scalar_prefetch = 0 : i64, scratch_operands = 0 : i64, tpu.core_type = #tpu.core_type<tc>, window_params = [{transform_indices = @transform_0, window_bounds = array<i64: 1, 4, 128>}, {transform_indices = @transform_1, window_bounds = array<i64: 1, 4, 128>}]} {
    %c0 = arith.constant 0 : index
    %c0_0 = arith.constant 0 : index
    %c0_1 = arith.constant 0 : index
    %0 = vector.load %arg3[%c0, %c0_0, %c0_1] : memref<1x4x128xf32, #tpu.memory_space<vmem>>, vector<1x4x128xf32>
    %c0_2 = arith.constant 0 : index
    %c0_3 = arith.constant 0 : index
    %c0_4 = arith.constant 0 : index
    %1 = vector.load %arg4[%c0_2, %c0_3, %c0_4] : memref<1x4x128xf32, #tpu.memory_space<vmem>>, vector<1x4x128xf32>
    tpu.vector_store %arg4[%c0_2, %c0_3, %c0_4], %0 {strides = array<i32>} : memref<1x4x128xf32, #tpu.memory_space<vmem>>, vector<1x4x128xf32>,
    return
  }
  func.func @transform_0(%arg0: i32, %arg1: i32, %arg2: i32) -> (i32, i32, i32) {
    %c0_i32 = arith.constant 0 : i32
    return %arg0, %arg1, %arg2 : i32, i32, i32
  }
  func.func @transform_1(%arg0: i32, %arg1: i32, %arg2: i32) -> (i32, i32, i32) {
    %c0_i32 = arith.constant 0 : i32
    return %arg0, %arg1, %arg2 : i32, i32, i32
  }
}

</mosaic_0001>

<llo_original>
// kernel: tpu_custom_call.1
$region0: #{tpu_custom_call.1}
  #allocation0 [shape = 'u32[]', space=smem, size = 0x4, offset = 0x4, fixed_abs, tag = 'smem constant byte address 0x4 - core index']
  #allocation1 [shape = 'u32[144,128]{1,0:T(1,128)}', space=vmem, size = 0x12000, scoped, tag = 'internal scratch']
  %s0 = inlined_call_operand.hbm [shape: f32[2,4,16], index: 0, kind: input, shape index: {}]
  %s1 = inlined_call_operand.hbm [shape: f32[2,4,13], index: 1, kind: output, shape index: {}]
  %s2 = sld [smem:[#allocation0]]
  $region41: #{tpu_custom_call.1} parent=0
    _
  %s4 = ssub.s32 1, %s2
  %s5 = scalar_select 0, %s4, %s2
  $region1: #{tpu_custom_call.1} parent=0
    #allocation2 [shape = 'u8[4096]{0}', space=vmem, size = 0x1000, scoped, tag = 'input window, operand 0']
    #allocation3 [shape = 's32[2]{0}', space=sflag, size = 0x8, scoped, tag = 'scoped memory for tpu_custom_call.1']
    #allocation4 [shape = 's32[2]{0}', space=sflag, size = 0x8, scoped, tag = 'scoped memory for tpu_custom_call.1']
    #allocation5 [shape = 'u8[4096]{0}', space=vmem, size = 0x1000, scoped, tag = 'output window, operand 0']
    %6 = vsyncpa [#allocation3], 0
    %s7 = scalar_lea.sflag [#allocation3], 1
    %8 = vsyncpa %s7, 0
    %9 = vsyncpa [#allocation4], 0
    %s10 = scalar_lea.sflag [#allocation4], 1
    %11 = vsyncpa %s10, 0
    loop: start=0, step=1, limit=4
    $region2: #{tpu_custom_call.1} parent=1 // loop_pre_header
      _
    $region3: #{tpu_custom_call.1} parent=1 // loop_header
      %s13 = sphi 0, %s17
      %p14 = scmp.ge.s32.totalorder %s13, 4
      %s20 = sphi 0, %s39
      %s21 = sphi 0, %s35
      %s22 = sphi 0, %s31
      %s23 = sphi 0, %s20
      %s24 = sphi 0, %s21
      %s25 = sphi 0, %s22
      %s26 = sphi 0, %s23
      %s27 = sphi 0, %s24
      %s28 = sphi 0, %s25
      %s46 = sphi 0, %s48
      %s49 = sphi 0, %s46
      %s50 = sphi 0, %s49
      %s66 = sphi 0, %s50
      %s76 = sphi 0, %s78
      %s79 = sphi 0, %s76
      %s80 = sphi 0, %s79
      %s96 = sphi 0, %s80
    $region4: #{tpu_custom_call.1} parent=1 // loop_header_branch
      %16 = sbr.rel (%p14) target = $region8
    $region5: #{tpu_custom_call.1} parent=1 // loop_body
      %s18 = ssub.s32 %s13, 1
      %s19 = ssub.s32 %s13, 2
      %s29 = sadd.s32 1, %s22
      %p30 = scmp.ge.s32.totalorder %s29, 1
      %s31 = scalar_select %p30, 0, %s29
      %s32 = sadd.s32 1, %s21
      %s33 = scalar_select %p30, %s32, %s21
      %p34 = scmp.ge.s32.totalorder %s33, 1
      %s35 = scalar_select %p34, 0, %s33
      %s36 = sadd.s32 1, %s20
      %s37 = scalar_select %p34, %s36, %s20
      %p38 = scmp.ge.s32.totalorder %s37, 2
      %s39 = scalar_select %p38, 0, %s37
      %s40 = ssub.s32 %s20, %s39
      %s41 = ssub.s32 %s21, %s35
      %s42 = sor.u32 %s40, %s41
      %s43 = ssub.s32 %s22, %s31
      %s44 = sor.u32 %s42, %s43
      %p45 = scmp.eq.s32.totalorder %s44, 0
      %s47 = sadd.s32 %s46, 1
      %s48 = scalar_select %p45, %s46, %s47
      %p51 = pneg %p45
      %p52 = scmp.eq.s32.totalorder %s13, 1
      %p53 = por %p51, %p52
      %p54 = scmp.ne.s32.totalorder %s46, %s49
      %p55 = scmp.eq.s32.totalorder %s13, 0
      %p56 = por %p54, %p55
      %p57 = scmp.ne.s32.totalorder %s46, %s49
      %p58 = scmp.eq.s32.totalorder %s18, 1
      %p59 = por %p57, %p58
      %p60 = scmp.ne.s32.totalorder %s49, %s50
      %p61 = scmp.eq.s32.totalorder %s18, 0
      %p62 = por %p60, %p61
      %p63 = scmp.ne.s32.totalorder %s49, %s50
      %p64 = scmp.eq.s32.totalorder %s19, 1
      %p65 = por %p63, %p64
      %p67 = scmp.ne.s32.totalorder %s50, %s66
      %p68 = scmp.eq.s32.totalorder %s19, 0
      %p69 = por %p67, %p68
      %s70 = ssub.s32 %s20, %s39
      %s71 = ssub.s32 %s21, %s35
      %s72 = sor.u32 %s70, %s71
      %s73 = ssub.s32 %s22, %s31
      %s74 = sor.u32 %s72, %s73
      %p75 = scmp.eq.s32.totalorder %s74, 0
      %s77 = sadd.s32 %s76, 1
      %s78 = scalar_select %p75, %s76, %s77
      %p81 = pneg %p75
      %p82 = scmp.eq.s32.totalorder %s13, 1
      %p83 = por %p81, %p82
      %p84 = scmp.ne.s32.totalorder %s76, %s79
      %p85 = scmp.eq.s32.totalorder %s13, 0
      %p86 = por %p84, %p85
      %p87 = scmp.ne.s32.totalorder %s76, %s79
      %p88 = scmp.eq.s32.totalorder %s18, 1
      %p89 = por %p87, %p88
      %p90 = scmp.ne.s32.totalorder %s79, %s80
      %p91 = scmp.eq.s32.totalorder %s18, 0
      %p92 = por %p90, %p91
      %p93 = scmp.ne.s32.totalorder %s79, %s80
      %p94 = scmp.eq.s32.totalorder %s19, 1
      %p95 = por %p93, %p94
      %p97 = scmp.ne.s32.totalorder %s80, %s96
      %p98 = scmp.eq.s32.totalorder %s19, 0
      %p99 = por %p97, %p98
      %p100 = scmp.le.s32.totalorder 1, %s13
      %p101 = scmp.lt.s32.totalorder %s13, 3
      %p102 = pnand %p100, %p101
      %p103 = pneg %p102
      // Predicated region
      $region9: #{tpu_custom_call.1} parent=5 // pred_check
        _
      $region10: #{tpu_custom_call.1} parent=5 // pred_check_branch
        %105 = sbr.rel (%p102) target = $region12
      $region11: #{tpu_custom_call.1} parent=5 // pred_region
        %s106 = ssub.s32 %s13, 1
      $region12: #{tpu_custom_call.1} parent=5 // pred_fallthru
        _
      %p107 = scmp.lt.s32.totalorder %s13, 2
      // Predicated region
      $region13: #{tpu_custom_call.1} parent=5 // pred_check
        %p108 = pneg %p107
      $region14: #{tpu_custom_call.1} parent=5 // pred_check_branch
        %110 = sbr.rel (%p108) target = $region16
      $region15: #{tpu_custom_call.1} parent=5 // pred_region
        // Predicated region
        $region17: #{tpu_custom_call.1} parent=15 // pred_check
          %p111 = pneg %p56
        $region18: #{tpu_custom_call.1} parent=15 // pred_check_branch
          %113 = sbr.rel (%p111) target = $region20
        $region19: #{tpu_custom_call.1} parent=15 // pred_region
          %s114 = sand.u32 %s46, 1
          %s115 = scalar_lea.sflag [#allocation3], %s114
          %s116 = sand.u32 %s46, 1
          %s117 = smul.addr %s116, 4
          %s118 = scalar_lea.vmem [#allocation2], %s117
          %s120 = ssub.s32 64, 64
          %121 = vsyncadd %s115, %s120
          %s122 = sadd.s32 %s22, %s21
          %s123 = sadd.s32 %s122, %s20
          %s124 = smul.addr %s123, 64
          %s125 = scalar_lea.hbm %s0, %s124
          %s127 = sshll.u32 %s118, 4
          %s128 = int_to_ptr.vmem [resolvable:$true] %s127
          %130 = dma.hbm_to_vmem [thread:$0]  %s125, 64, %s128, %s115
        $region20: #{tpu_custom_call.1} parent=15 // pred_fallthru
          _
      $region16: #{tpu_custom_call.1} parent=5 // pred_fallthru
        _
      %p131 = scmp.le.s32.totalorder 1, %s13
      %p132 = scmp.lt.s32.totalorder %s13, 3
      %p133 = pnand %p131, %p132
      %p134 = pneg %p133
      // Predicated region
      $region21: #{tpu_custom_call.1} parent=5 // pred_check
        _
      $region22: #{tpu_custom_call.1} parent=5 // pred_check_branch
        %136 = sbr.rel (%p133) target = $region24
      $region23: #{tpu_custom_call.1} parent=5 // pred_region
        %s137 = ssub.s32 %s13, 1
        %s138 = sand.u32 %s49, 1
        %s139 = scalar_lea.sflag [#allocation3], %s138
        %s140 = sand.u32 %s49, 1
        %s141 = smul.addr %s140, 4
        %s142 = scalar_lea.vmem [#allocation2], %s141
        // Predicated region
        $region25: #{tpu_custom_call.1} parent=23 // pred_check
          %p143 = pneg %p62
        $region26: #{tpu_custom_call.1} parent=23 // pred_check_branch
          %145 = sbr.rel (%p143) target = $region28
        $region27: #{tpu_custom_call.1} parent=23 // pred_region
          %146 = dma.done %s139, 64
        $region28: #{tpu_custom_call.1} parent=23 // pred_fallthru
          _
        %s147 = sand.u32 %s49, 1
        %s148 = scalar_lea.sflag [#allocation3], %s147
        %s149 = sand.u32 %s49, 1
        %s150 = smul.addr %s149, 4
        %s151 = scalar_lea.vmem [#allocation2], %s150
        %p152 = pneg %p62
        %p153 = pneg %p59
        %p154 = pneg %p92
        %p155 = pneg %p89
        %s156 = sand.u32 %s79, 1
        %s157 = scalar_lea.sflag [#allocation4], %s156
        %s158 = sand.u32 %s79, 1
        %s159 = smul.addr %s158, 4
        %s160 = scalar_lea.vmem [#allocation5], %s159
        %v161 = vld [vmem:[%s142] sm:$0xf]
        %162 = vst [vmem:[%s160] sm:$0xf] %v161
        %s163 = sand.u32 %s79, 1
        %s164 = scalar_lea.sflag [#allocation4], %s163
        %s165 = sand.u32 %s79, 1
        %s166 = smul.addr %s165, 4
        %s167 = scalar_lea.vmem [#allocation5], %s166
        // Predicated region
        $region29: #{tpu_custom_call.1} parent=23 // pred_check
          %p168 = pneg %p89
        $region30: #{tpu_custom_call.1} parent=23 // pred_check_branch
          %170 = sbr.rel (%p168) target = $region32
        $region31: #{tpu_custom_call.1} parent=23 // pred_region
          %s172 = ssub.s32 64, 64
          %173 = vsyncadd %s164, %s172
          %s174 = sadd.s32 %s25, %s24
          %s175 = sadd.s32 %s174, %s23
          %s176 = smul.addr %s175, 64
          %s177 = scalar_lea.hbm %s1, %s176
          %s179 = sshll.u32 %s167, 4
          %s180 = int_to_ptr.vmem [resolvable:$true] %s179
          %182 = dma.vmem_to_hbm [thread:$0]  %s180, 64, %s177, %s164
        $region32: #{tpu_custom_call.1} parent=23 // pred_fallthru
          _
      $region24: #{tpu_custom_call.1} parent=5 // pred_fallthru
        _
      %p183 = scmp.le.s32.totalorder 2, %s13
      // Predicated region
      $region33: #{tpu_custom_call.1} parent=5 // pred_check
        %p184 = pneg %p183
      $region34: #{tpu_custom_call.1} parent=5 // pred_check_branch
        %186 = sbr.rel (%p184) target = $region36
      $region35: #{tpu_custom_call.1} parent=5 // pred_region
        %s187 = ssub.s32 %s13, 2
        // Predicated region
        $region37: #{tpu_custom_call.1} parent=35 // pred_check
          %p188 = pneg %p95
        $region38: #{tpu_custom_call.1} parent=35 // pred_check_branch
          %190 = sbr.rel (%p188) target = $region40
        $region39: #{tpu_custom_call.1} parent=35 // pred_region
          %s191 = sand.u32 %s80, 1
          %s192 = scalar_lea.sflag [#allocation4], %s191
          %s193 = sand.u32 %s80, 1
          %s194 = smul.addr %s193, 4
          %s195 = scalar_lea.vmem [#allocation5], %s194
          %196 = dma.done %s192, 64
        $region40: #{tpu_custom_call.1} parent=35 // pred_fallthru
          _
      $region36: #{tpu_custom_call.1} parent=5 // pred_fallthru
        _
    $region6: #{tpu_custom_call.1} parent=1 // loop_footer
      %s17 = sadd.s32 1, %s13
    $region7: #{tpu_custom_call.1} parent=1 // loop_footer_branch
      %12 = sbr.rel target = $region3
    $region8: #{tpu_custom_call.1} parent=1 // loop_exit
      _
    %197 = vsyncpa [#allocation3], 1
    %s198 = scalar_lea.sflag [#allocation3], 1
    %199 = vsyncpa %s198, 1
    %200 = vsyncpa [#allocation4], 1
    %s201 = scalar_lea.sflag [#allocation4], 1
    %202 = vsyncpa %s201, 1

</llo_original>
